<compile_context>
chip_gen: v5e
topology: v5e:2x2
jax: 0.10.0
libtpu: 0.0.40
codegen_flags: <defaults>
</compile_context>

<pallas_src>
import jax
import jax.numpy as jnp
from jax.experimental import pallas as pl
from jax.experimental.pallas import tpu as pltpu


_LANE = 128
_VMEM_TILE_BUDGET = 36 * (1 << 20)   # working-set budget used to size the spatial tile
_VMEM_LIMIT_BYTES = 56 * (1 << 20)   # explicit scoped-VMEM limit (<= 64 MiB -> v7x safe)


def _bf16_compute_supported():
    """bf16 VPU/EUP exists on v6e/v7x but not v5e/v4 — gate the bf16 exp path."""
    try:
        kind = jax.devices()[0].device_kind.lower()
    except Exception:
        return False
    return ("v6" in kind) or ("v7" in kind) or ("7x" in kind)


def _make_rce_kernel(C, N, TN, has_mask, compute_dtype):
    """Build the per-tile kernel. C, N, TN, has_mask, compute_dtype are trace-time consts."""
    need_pad = (N % TN) != 0
    cdt = jnp.dtype(compute_dtype)

    def kernel(*refs):
        if has_mask:
            logits_ref, target_ref, mask_ref, ce_ref, rp_ref, rt_ref = refs
        else:
            logits_ref, target_ref, ce_ref, rp_ref, rt_ref = refs
            mask_ref = None

        n = pl.program_id(1)

        # init the resident accumulators once per batch element
        @pl.when(n == 0)
        def _():
            ce_ref[...] = jnp.zeros_like(ce_ref)
            rp_ref[...] = jnp.zeros_like(rp_ref)
            rt_ref[...] = jnp.zeros_like(rt_ref)

        # logits stay in storage dtype on the wire; bf16 stays bf16 through exp on
        # v6e/v7x, everything else computes in f32.
        x = logits_ref[0]                               # (C, TN)
        if x.dtype != cdt:
            x = x.astype(cdt)
        t = target_ref[0].astype(jnp.int32)             # (1, TN), shipped as int8

        if need_pad:
            # only the last tile is actually ragged; the divisor-preferring tile
            # choice in the wrapper usually compiles this path out entirely.
            lane = jax.lax.broadcasted_iota(jnp.int32, (1, TN), 1)
            valid = (n * TN + lane) < N                 # (1, TN) bool
            vmask = valid.astype(jnp.float32)
            x = jnp.where(valid, x, 0.0)                # sanitize OOB lanes (garbage/NaN)

        # softmax building blocks along the class (sublane) axis
        x_max = jnp.max(x, axis=0, keepdims=True)       # (1, TN) compute dtype
        e = jnp.exp(x - x_max)                          # (C, TN) compute dtype (EUP)
        e32 = e if cdt == jnp.dtype(jnp.float32) else e.astype(jnp.float32)
        s = jnp.sum(e32, axis=0, keepdims=True)         # (1, TN) f32

        # one-hot target over the class axis
        cls = jax.lax.broadcasted_iota(jnp.int32, (C, TN), 0)
        eq = cls == t                                   # (C, TN) bool

        # cross-entropy without materializing log-softmax:
        #   -log p[t] = log(sum_c exp(x_c - max)) + max - x[t]
        x_tgt = jnp.sum(jnp.where(eq, x, 0.0), axis=0,
                        keepdims=True).astype(jnp.float32)          # (1, TN)
        ce_pix = jnp.log(s) + x_max.astype(jnp.float32) - x_tgt     # (1, TN)
        if need_pad:
            ce_pix = ce_pix * vmask                     # CE ignores loss_mask, only padding
        ce_ref[...] += jnp.sum(ce_pix).reshape(1, 1, 1)

        # region sums: probs = e / s folded into one per-pixel weight (EUP recip)
        inv_s = pl.reciprocal(s, approx=True)           # (1, TN)
        if has_mask:
            m = mask_ref[0].astype(jnp.float32)         # (1, TN), shipped as int8
            if need_pad:
                m = m * vmask
            w = m * inv_s
            yt = eq.astype(jnp.float32) * m
        else:
            w = (vmask * inv_s) if need_pad else inv_s
            yt = eq.astype(jnp.float32)
            if need_pad:
                yt = yt * vmask

        rp_ref[...] += jnp.sum(e32 * w, axis=1, keepdims=True).reshape(1, C, 1)
        rt_ref[...] += jnp.sum(yt, axis=1, keepdims=True).reshape(1, C, 1)

    return kernel


def _pick_tile_n(N, C, logits_itemsize, compute_itemsize):
    """Largest lane tile (multiple of 128) whose double-buffered inputs plus the live
    in-kernel temporaries fit the VMEM budget; prefer a divisor of N (no ragged
    last tile) if one exists within 2x of that maximum."""
    per_lane = (2 * C * logits_itemsize          # logits tile, double-buffered
                + 2 * 2                          # int8 target + int8 mask, double-buffered
                + 4 * C * compute_itemsize       # (C, TN) temporaries in compute dtype
                + 2 * C * 4                      # (C, TN) temporaries in f32
                + 8 * 4)                         # (1, TN) rows (max, sum, w, ce, ...)
    tn = _VMEM_TILE_BUDGET // max(1, per_lane)
    tn = max((tn // _LANE) * _LANE, _LANE)
    if N <= tn:
        return N                                 # full-extent block: always legal, no padding
    best = tn
    while tn >= max(_LANE, best // 2):
        if N % tn == 0:
            return tn                            # no ragged last tile -> need_pad compiled out
        tn -= _LANE
    return best


def rce_l1_loss(logits, target, loss_mask=None, lambda_reg=1.0, tile_n=None):
    """JAX/Pallas equivalent of RCE_L1Loss.forward (apply_nonlin=None -> softmax)."""
    # mirror the target.squeeze(1) handling of the PyTorch module
    if target.ndim == logits.ndim and target.shape[1] == 1:
        target = jnp.squeeze(target, axis=1)

    B, C = logits.shape[:2]
    N = 1
    for d in logits.shape[2:]:
        N *= d

    # logits stay in their storage dtype (bf16 stays bf16 -> half the HBM bytes)
    logits_f = logits.reshape(B, C, N)

    # aux streams are the other big HBM cost for small C: ship them as 1 B/pixel
    tgt_dtype = jnp.int8 if C <= 127 else jnp.int32
    target_f = target.reshape(B, 1, N)
    if target_f.dtype != jnp.dtype(tgt_dtype):
        target_f = target_f.astype(tgt_dtype)

    has_mask = loss_mask is not None
    inputs = [logits_f, target_f]
    if has_mask:
        # nnU-Net loss masks are binary; ship as int8 (cast back to f32 in-kernel)
        mask_f = (loss_mask.reshape(B, 1, N) != 0).astype(jnp.int8)
        inputs.append(mask_f)

    compute_dtype = (jnp.bfloat16
                     if logits_f.dtype == jnp.bfloat16 and _bf16_compute_supported()
                     else jnp.float32)

    if tile_n is None:
        tile_n = _pick_tile_n(N, C,
                              jnp.dtype(logits_f.dtype).itemsize,
                              jnp.dtype(compute_dtype).itemsize)
    tile_n = min(int(tile_n), N)
    if tile_n != N and tile_n % _LANE != 0:
        raise ValueError("tile_n must be a multiple of 128 or equal to N")
    num_n = pl.cdiv(N, tile_n)

    kernel = _make_rce_kernel(C, N, tile_n, has_mask, compute_dtype)

    in_specs = [
        pl.BlockSpec((1, C, tile_n), lambda b, n: (b, 0, n)),
        pl.BlockSpec((1, 1, tile_n), lambda b, n: (b, 0, n)),
    ]
    if has_mask:
        in_specs.append(pl.BlockSpec((1, 1, tile_n), lambda b, n: (b, 0, n)))

    out_shapes = (
        jax.ShapeDtypeStruct((B, 1, 1), jnp.float32),   # ce sums
        jax.ShapeDtypeStruct((B, C, 1), jnp.float32),   # raw region_pred
        jax.ShapeDtypeStruct((B, C, 1), jnp.float32),   # raw region_target
    )
    out_specs = (
        pl.BlockSpec((1, 1, 1), lambda b, n: (b, 0, 0)),   # resident across n
        pl.BlockSpec((1, C, 1), lambda b, n: (b, 0, 0)),
        pl.BlockSpec((1, C, 1), lambda b, n: (b, 0, 0)),
    )

    ce_sum, rp_raw, rt_raw = pl.pallas_call(
        kernel,
        out_shape=out_shapes,
        grid_spec=pltpu.PrefetchScalarGridSpec(
            num_scalar_prefetch=0,
            grid=(B, num_n),
            in_specs=in_specs,
            out_specs=out_specs,
        ),
        compiler_params=pltpu.CompilerParams(
            dimension_semantics=("parallel", "arbitrary"),
            vmem_limit_bytes=_VMEM_LIMIT_BYTES),
    )(*inputs)

    # nn.CrossEntropyLoss(reduction='mean') over all B*N pixels (mask not used in CE)
    # TODO(synk): no ignore_index handling (torch default -100); nnU-Net targets are valid labels.
    ce_loss = jnp.sum(ce_sum) / float(B * N)

    rp = rp_raw[..., 0]                                            # (B, C)
    rt = rt_raw[..., 0]                                            # (B, C)
    rp = rp / jnp.maximum(jnp.sum(rp, axis=1, keepdims=True), 1e-6)
    rt = rt / jnp.maximum(jnp.sum(rt, axis=1, keepdims=True), 1e-6)

    # ddp=True uses AllGatherGrad(...).sum(0); identity on a single device.
    l1_penalty = jnp.mean(jnp.abs(rp - rt))
    return ce_loss + lambda_reg * l1_penalty


def _reference(logits, target, loss_mask=None, lambda_reg=1.0):
    """Pure-JAX reference mirroring the PyTorch semantics (ddp no-op)."""
    B, C = logits.shape[:2]
    N = 1
    for d in logits.shape[2:]:
        N *= d
    x = logits.reshape(B, C, N).astype(jnp.float32)
    t = target.reshape(B, N)
    logp = jax.nn.log_softmax(x, axis=1)
    probs = jax.nn.softmax(x, axis=1)
    y = jax.nn.one_hot(t, C, axis=1, dtype=jnp.float32)            # (B, C, N)
    ce = -jnp.mean(jnp.sum(y * logp, axis=1))
    if loss_mask is not None:
        m = loss_mask.reshape(B, 1, N).astype(jnp.float32)
        probs_m, y_m = probs * m, y * m
    else:
        probs_m, y_m = probs, y
    rp = probs_m.sum(axis=2)
    rp = rp / jnp.maximum(rp.sum(axis=1, keepdims=True), 1e-6)
    rt = y_m.sum(axis=2)
    rt = rt / jnp.maximum(rt.sum(axis=1, keepdims=True), 1e-6)
    l1 = jnp.mean(jnp.abs(rp - rt))
    return ce + lambda_reg * l1


if __name__ == "__main__":
    key = jax.random.PRNGKey(0)
    k1, k2, k3 = jax.random.split(key, 3)

    B, C, H, W = 2, 4, 16, 16
    logits = jax.random.normal(k1, (B, C, H, W), dtype=jnp.float32)
    target = jax.random.randint(k2, (B, H, W), 0, C, dtype=jnp.int32)

    # tolerance is relaxed vs 1e-5 because rp uses the EUP approximate reciprocal
    TOL = 2e-3

    # 1) default path (small shape -> single full-extent spatial tile per batch element)
    loss = jax.block_until_ready(rce_l1_loss(logits, target))
    ref = jax.block_until_ready(_reference(logits, target))
    assert jnp.allclose(loss, ref, atol=TOL, rtol=TOL), (float(loss), float(ref))

    # 2) multi-tile accumulation path (grid n > 1, int8 target stream)
    loss_t = jax.block_until_ready(rce_l1_loss(logits, target, tile_n=128))
    assert jnp.allclose(loss_t, ref, atol=TOL, rtol=TOL), (float(loss_t), float(ref))

    # 3) ragged last tile + int8 loss_mask + bf16 logits (bf16 exp path on v6e/v7x)
    Hp, Wp = 16, 15                                     # N = 240, tile_n = 128 -> padded tile
    logits_p = jax.random.normal(k1, (B, C, Hp, Wp), dtype=jnp.bfloat16)
    target_p = jax.random.randint(k2, (B, Hp, Wp), 0, C, dtype=jnp.int32)
    mask_p = (jax.random.uniform(k3, (B, 1, Hp, Wp)) > 0.3).astype(jnp.float32)
    loss_p = jax.block_until_ready(
        rce_l1_loss(logits_p, target_p, loss_mask=mask_p, tile_n=128))
    ref_p = jax.block_until_ready(_reference(logits_p, target_p, loss_mask=mask_p))
    # tolerance relaxed further: bf16 exp on v6e/v7x + approx reciprocal vs f32 reference
    assert jnp.allclose(loss_p, ref_p, atol=2e-2, rtol=2e-2), (float(loss_p), float(ref_p))

    print("KERNEL_OK")
</pallas_src>

<mosaic_0001>
module attributes {stable_mosaic.version = 11 : i64} {
  func.func @kernel(%arg0: i32, %arg1: i32, %arg2: memref<1x4x256xf32, #tpu.memory_space<vmem>>, %arg3: memref<1x1x256xi8, #tpu.memory_space<vmem>>, %arg4: memref<1x1x1xf32, #tpu.memory_space<vmem>>, %arg5: memref<1x4x1xf32, #tpu.memory_space<vmem>>, %arg6: memref<1x4x1xf32, #tpu.memory_space<vmem>>) attributes {dimension_semantics = [#tpu.dimension_semantics<parallel>, #tpu.dimension_semantics<arbitrary>], iteration_bounds = array<i64: 2, 1>, scalar_prefetch = 0 : i64, scratch_operands = 0 : i64, tpu.core_type = #tpu.core_type<tc>, window_params = [{transform_indices = @transform_0, window_bounds = array<i64: 1, 4, 256>}, {transform_indices = @transform_1, window_bounds = array<i64: 1, 1, 256>}, {transform_indices = @transform_2, window_bounds = array<i64: 1, 1, 1>}, {transform_indices = @transform_3, window_bounds = array<i64: 1, 4, 1>}, {transform_indices = @transform_4, window_bounds = array<i64: 1, 4, 1>}]} {
    %c0_i32 = arith.constant 0 : i32
    %0 = arith.cmpi eq, %arg1, %c0_i32 : i32
    %1 = arith.extui %0 : i1 to i32
    %c0_i32_0 = arith.constant 0 : i32
    %2 = arith.cmpi ne, %1, %c0_i32_0 : i32
    scf.if %2 {
      %cst_30 = arith.constant 0.000000e+00 : f32
      %50 = vector.broadcast %cst_30 : f32 to vector<1x1x1xf32>
      %c0_31 = arith.constant 0 : index
      %c0_32 = arith.constant 0 : index
      %c0_33 = arith.constant 0 : index
      %51 = vector.load %arg4[%c0_31, %c0_32, %c0_33] : memref<1x1x1xf32, #tpu.memory_space<vmem>>, vector<1x1x1xf32>
      tpu.vector_store %arg4[%c0_31, %c0_32, %c0_33], %50 {strides = array<i32>} : memref<1x1x1xf32, #tpu.memory_space<vmem>>, vector<1x1x1xf32>,
      %cst_34 = arith.constant 0.000000e+00 : f32
      %52 = vector.broadcast %cst_34 : f32 to vector<1x4x1xf32>
      %c0_35 = arith.constant 0 : index
      %c0_36 = arith.constant 0 : index
      %c0_37 = arith.constant 0 : index
      %53 = vector.load %arg5[%c0_35, %c0_36, %c0_37] : memref<1x4x1xf32, #tpu.memory_space<vmem>>, vector<1x4x1xf32>
      tpu.vector_store %arg5[%c0_35, %c0_36, %c0_37], %52 {strides = array<i32>} : memref<1x4x1xf32, #tpu.memory_space<vmem>>, vector<1x4x1xf32>,
      %cst_38 = arith.constant 0.000000e+00 : f32
      %54 = vector.broadcast %cst_38 : f32 to vector<1x4x1xf32>
      %c0_39 = arith.constant 0 : index
      %c0_40 = arith.constant 0 : index
      %c0_41 = arith.constant 0 : index
      %55 = vector.load %arg6[%c0_39, %c0_40, %c0_41] : memref<1x4x1xf32, #tpu.memory_space<vmem>>, vector<1x4x1xf32>
      tpu.vector_store %arg6[%c0_39, %c0_40, %c0_41], %54 {strides = array<i32>} : memref<1x4x1xf32, #tpu.memory_space<vmem>>, vector<1x4x1xf32>,
    } else {
    }
    %c0 = arith.constant 0 : index
    %c0_1 = arith.constant 0 : index
    %c0_2 = arith.constant 0 : index
    %3 = vector.load %arg2[%c0, %c0_1, %c0_2] : memref<1x4x256xf32, #tpu.memory_space<vmem>>, vector<1x4x256xf32>
    %4 = vector.shape_cast %3 : vector<1x4x256xf32> to vector<4x256xf32>
    %c0_3 = arith.constant 0 : index
    %c0_4 = arith.constant 0 : index
    %c0_5 = arith.constant 0 : index
    %5 = vector.load %arg3[%c0_3, %c0_4, %c0_5] : memref<1x1x256xi8, #tpu.memory_space<vmem>>, vector<1x1x256xi8>
    %6 = vector.shape_cast %5 : vector<1x1x256xi8> to vector<1x256xi8>
    %7 = arith.extsi %6 : vector<1x256xi8> to vector<1x256xi32>
    %cst = arith.constant dense<0xFF800000> : vector<256xf32>
    %8 = vector.multi_reduction <maximumf>, %4, %cst [0] : vector<4x256xf32> to vector<256xf32>
    %9 = vector.shape_cast %8 : vector<256xf32> to vector<1x256xf32>
    %10 = vector.broadcast %9 : vector<1x256xf32> to vector<4x256xf32>
    %11 = arith.subf %4, %10 : vector<4x256xf32>
    %12 = math.exp %11 : vector<4x256xf32>
    %cst_6 = arith.constant dense<0.000000e+00> : vector<256xf32>
    %13 = vector.multi_reduction <add>, %12, %cst_6 [0] : vector<4x256xf32> to vector<256xf32>
    %14 = vector.shape_cast %13 : vector<256xf32> to vector<1x256xf32>
    %15 = tpu.iota {dimensions = array<i32: 0>} : vector<4x256xi32>
    %16 = vector.broadcast %7 : vector<1x256xi32> to vector<4x256xi32>
    %17 = arith.cmpi eq, %15, %16 : vector<4x256xi32>
    %cst_7 = arith.constant 0.000000e+00 : f32
    %18 = vector.broadcast %cst_7 : f32 to vector<4x256xf32>
    %19 = arith.select %17, %4, %18 : vector<4x256xi1>, vector<4x256xf32>
    %cst_8 = arith.constant dense<0.000000e+00> : vector<256xf32>
    %20 = vector.multi_reduction <add>, %19, %cst_8 [0] : vector<4x256xf32> to vector<256xf32>
    %21 = vector.shape_cast %20 : vector<256xf32> to vector<1x256xf32>
    %22 = math.log %14 : vector<1x256xf32>
    %23 = arith.addf %22, %9 : vector<1x256xf32>
    %24 = arith.subf %23, %21 : vector<1x256xf32>
    %c0_9 = arith.constant 0 : index
    %c0_10 = arith.constant 0 : index
    %c0_11 = arith.constant 0 : index
    %25 = vector.load %arg4[%c0_9, %c0_10, %c0_11] : memref<1x1x1xf32, #tpu.memory_space<vmem>>, vector<1x1x1xf32>
    %26 = vector.shape_cast %24 : vector<1x256xf32> to vector<1x1x256xf32>
    %cst_12 = arith.constant dense<0.000000e+00> : vector<1xf32>
    %27 = vector.multi_reduction <add>, %26, %cst_12 [1, 2] : vector<1x1x256xf32> to vector<1xf32>
    %28 = vector.shape_cast %27 : vector<1xf32> to vector<1x1x1xf32>
    %29 = vector.extract %28[0, 0, 0] : f32 from vector<1x1x1xf32>
    %30 = vector.broadcast %29 : f32 to vector<1x1x1xf32>
    %31 = arith.addf %25, %30 : vector<1x1x1xf32>
    %c0_13 = arith.constant 0 : index
    %c0_14 = arith.constant 0 : index
    %c0_15 = arith.constant 0 : index
    %32 = vector.load %arg4[%c0_13, %c0_14, %c0_15] : memref<1x1x1xf32, #tpu.memory_space<vmem>>, vector<1x1x1xf32>
    tpu.vector_store %arg4[%c0_13, %c0_14, %c0_15], %31 {strides = array<i32>} : memref<1x1x1xf32, #tpu.memory_space<vmem>>, vector<1x1x1xf32>,
    %33 = tpu.reciprocal %14 {approx = true} : vector<1x256xf32> -> vector<1x256xf32>
    %34 = arith.extui %17 : vector<4x256xi1> to vector<4x256xi32>
    %35 = arith.sitofp %34 : vector<4x256xi32> to vector<4x256xf32>
    %c0_16 = arith.constant 0 : index
    %c0_17 = arith.constant 0 : index
    %c0_18 = arith.constant 0 : index
    %36 = vector.load %arg5[%c0_16, %c0_17, %c0_18] : memref<1x4x1xf32, #tpu.memory_space<vmem>>, vector<1x4x1xf32>
    %37 = vector.broadcast %33 : vector<1x256xf32> to vector<4x256xf32>
    %38 = arith.mulf %12, %37 : vector<4x256xf32>
    %cst_19 = arith.constant dense<0.000000e+00> : vector<4xf32>
    %39 = vector.multi_reduction <add>, %38, %cst_19 [1] : vector<4x256xf32> to vector<4xf32>
    %40 = vector.shape_cast %39 : vector<4xf32> to vector<4x1xf32>
    %41 = vector.shape_cast %40 : vector<4x1xf32> to vector<1x4x1xf32>
    %42 = arith.addf %36, %41 : vector<1x4x1xf32>
    %c0_20 = arith.constant 0 : index
    %c0_21 = arith.constant 0 : index
    %c0_22 = arith.constant 0 : index
    %43 = vector.load %arg5[%c0_20, %c0_21, %c0_22] : memref<1x4x1xf32, #tpu.memory_space<vmem>>, vector<1x4x1xf32>
    tpu.vector_store %arg5[%c0_20, %c0_21, %c0_22], %42 {strides = array<i32>} : memref<1x4x1xf32, #tpu.memory_space<vmem>>, vector<1x4x1xf32>,
    %c0_23 = arith.constant 0 : index
    %c0_24 = arith.constant 0 : index
    %c0_25 = arith.constant 0 : index
    %44 = vector.load %arg6[%c0_23, %c0_24, %c0_25] : memref<1x4x1xf32, #tpu.memory_space<vmem>>, vector<1x4x1xf32>
    %cst_26 = arith.constant dense<0.000000e+00> : vector<4xf32>
    %45 = vector.multi_reduction <add>, %35, %cst_26 [1] : vector<4x256xf32> to vector<4xf32>
    %46 = vector.shape_cast %45 : vector<4xf32> to vector<4x1xf32>
    %47 = vector.shape_cast %46 : vector<4x1xf32> to vector<1x4x1xf32>
    %48 = arith.addf %44, %47 : vector<1x4x1xf32>
    %c0_27 = arith.constant 0 : index
    %c0_28 = arith.constant 0 : index
    %c0_29 = arith.constant 0 : index
    %49 = vector.load %arg6[%c0_27, %c0_28, %c0_29] : memref<1x4x1xf32, #tpu.memory_space<vmem>>, vector<1x4x1xf32>
    tpu.vector_store %arg6[%c0_27, %c0_28, %c0_29], %48 {strides = array<i32>} : memref<1x4x1xf32, #tpu.memory_space<vmem>>, vector<1x4x1xf32>,
    return
  }
  func.func @transform_0(%arg0: i32, %arg1: i32) -> (i32, i32, i32) {
    %c0_i32 = arith.constant 0 : i32
    %c0_i32_0 = arith.constant 0 : i32
    return %arg0, %c0_i32, %arg1 : i32, i32, i32
  }
  func.func @transform_1(%arg0: i32, %arg1: i32) -> (i32, i32, i32) {
    %c0_i32 = arith.constant 0 : i32
    %c0_i32_0 = arith.constant 0 : i32
    return %arg0, %c0_i32, %arg1 : i32, i32, i32
  }
  func.func @transform_2(%arg0: i32, %arg1: i32) -> (i32, i32, i32) {
    %c0_i32 = arith.constant 0 : i32
    %c0_i32_0 = arith.constant 0 : i32
    %c0_i32_1 = arith.constant 0 : i32
    return %arg0, %c0_i32, %c0_i32_0 : i32, i32, i32
  }
  func.func @transform_3(%arg0: i32, %arg1: i32) -> (i32, i32, i32) {
    %c0_i32 = arith.constant 0 : i32
    %c0_i32_0 = arith.constant 0 : i32
    %c0_i32_1 = arith.constant 0 : i32
    return %arg0, %c0_i32, %c0_i32_0 : i32, i32, i32
  }
  func.func @transform_4(%arg0: i32, %arg1: i32) -> (i32, i32, i32) {
    %c0_i32 = arith.constant 0 : i32
    %c0_i32_0 = arith.constant 0 : i32
    %c0_i32_1 = arith.constant 0 : i32
    return %arg0, %c0_i32, %c0_i32_0 : i32, i32, i32
  }
}

</mosaic_0001>

<llo_original>
// kernel: tpu_custom_call.1
$region0: #{tpu_custom_call.1}
  #allocation0 [shape = 'u32[]', space=smem, size = 0x4, offset = 0x4, fixed_abs, tag = 'smem constant byte address 0x4 - core index']
  #allocation1 [shape = 'u32[72,128]{1,0:T(1,128)}', space=vmem, size = 0x9000, scoped, tag = 'internal scratch']
  %s0 = inlined_call_operand.hbm [shape: f32[2,4,256], index: 0, kind: input, shape index: {}]
  %s1 = inlined_call_operand.vmem [shape: s8[2,1,256], index: 1, kind: input, shape index: {}]
  %s2 = inlined_call_operand.vmem [shape: f32[2,1,1], index: 2, kind: output, shape index: {0}]
  %s3 = inlined_call_operand.vmem [shape: f32[2,4,1], index: 3, kind: output, shape index: {1}]
  %s4 = inlined_call_operand.vmem [shape: f32[2,4,1], index: 4, kind: output, shape index: {2}]
  %5 = xla_tuple %s2, %s3, %s4
  %s6 = sld [smem:[#allocation0]]
  $region65: #{tpu_custom_call.1} parent=0
    _
  %s8 = ssub.s32 1, %s6
  %s9 = scalar_select 0, %s8, %s6
  $region1: #{tpu_custom_call.1} parent=0
    #allocation2 [shape = 'u8[8192]{0}', space=vmem, size = 0x2000, scoped, tag = 'input window, operand 0']
    #allocation3 [shape = 's32[2]{0}', space=sflag, size = 0x8, scoped, tag = 'scoped memory for tpu_custom_call.1']
    %10 = vsyncpa [#allocation3], 0
    %s11 = scalar_lea.sflag [#allocation3], 1
    %12 = vsyncpa %s11, 0
    loop: start=0, step=1, limit=4
    $region2: #{tpu_custom_call.1} parent=1 // loop_pre_header
      _
    $region3: #{tpu_custom_call.1} parent=1 // loop_header
      %s14 = sphi 0, %s18
      %p15 = scmp.ge.s32.totalorder %s14, 4
      %s21 = sphi 0, %s33
      %s22 = sphi 0, %s29
      %s23 = sphi 0, %s21
      %s24 = sphi 0, %s22
      %s25 = sphi 0, %s23
      %s26 = sphi 0, %s24
      %s38 = sphi 0, %s40
      %s41 = sphi 0, %s38
      %s42 = sphi 0, %s41
      %s58 = sphi 0, %s42
      %s66 = sphi 0, %s68
      %s69 = sphi 0, %s66
      %s70 = sphi 0, %s69
      %s86 = sphi 0, %s70
      %s92 = sphi 0, %s94
      %s95 = sphi 0, %s92
      %s96 = sphi 0, %s95
      %s112 = sphi 0, %s96
      %s118 = sphi 0, %s120
      %s121 = sphi 0, %s118
      %s122 = sphi 0, %s121
      %s138 = sphi 0, %s122
      %s144 = sphi 0, %s146
      %s147 = sphi 0, %s144
      %s148 = sphi 0, %s147
      %s164 = sphi 0, %s148
    $region4: #{tpu_custom_call.1} parent=1 // loop_header_branch
      %17 = sbr.rel (%p15) target = $region8
    $region5: #{tpu_custom_call.1} parent=1 // loop_body
      %s19 = ssub.s32 %s14, 1
      %s20 = ssub.s32 %s14, 2
      %s27 = sadd.s32 1, %s22
      %p28 = scmp.ge.s32.totalorder %s27, 1
      %s29 = scalar_select %p28, 0, %s27
      %s30 = sadd.s32 1, %s21
      %s31 = scalar_select %p28, %s30, %s21
      %p32 = scmp.ge.s32.totalorder %s31, 2
      %s33 = scalar_select %p32, 0, %s31
      %s34 = ssub.s32 %s21, %s33
      %s35 = ssub.s32 %s22, %s29
      %s36 = sor.u32 %s34, %s35
      %p37 = scmp.eq.s32.totalorder %s36, 0
      %s39 = sadd.s32 %s38, 1
      %s40 = scalar_select %p37, %s38, %s39
      %p43 = pneg %p37
      %p44 = scmp.eq.s32.totalorder %s14, 1
      %p45 = por %p43, %p44
      %p46 = scmp.ne.s32.totalorder %s38, %s41
      %p47 = scmp.eq.s32.totalorder %s14, 0
      %p48 = por %p46, %p47
      %p49 = scmp.ne.s32.totalorder %s38, %s41
      %p50 = scmp.eq.s32.totalorder %s19, 1
      %p51 = por %p49, %p50
      %p52 = scmp.ne.s32.totalorder %s41, %s42
      %p53 = scmp.eq.s32.totalorder %s19, 0
      %p54 = por %p52, %p53
      %p55 = scmp.ne.s32.totalorder %s41, %s42
      %p56 = scmp.eq.s32.totalorder %s20, 1
      %p57 = por %p55, %p56
      %p59 = scmp.ne.s32.totalorder %s42, %s58
      %p60 = scmp.eq.s32.totalorder %s20, 0
      %p61 = por %p59, %p60
      %s62 = ssub.s32 %s21, %s33
      %s63 = ssub.s32 %s22, %s29
      %s64 = sor.u32 %s62, %s63
      %p65 = scmp.eq.s32.totalorder %s64, 0
      %s67 = sadd.s32 %s66, 1
      %s68 = scalar_select %p65, %s66, %s67
      %p71 = pneg %p65
      %p72 = scmp.eq.s32.totalorder %s14, 1
      %p73 = por %p71, %p72
      %p74 = scmp.ne.s32.totalorder %s66, %s69
      %p75 = scmp.eq.s32.totalorder %s14, 0
      %p76 = por %p74, %p75
      %p77 = scmp.ne.s32.totalorder %s66, %s69
      %p78 = scmp.eq.s32.totalorder %s19, 1
      %p79 = por %p77, %p78
      %p80 = scmp.ne.s32.totalorder %s69, %s70
      %p81 = scmp.eq.s32.totalorder %s19, 0
      %p82 = por %p80, %p81
      %p83 = scmp.ne.s32.totalorder %s69, %s70
      %p84 = scmp.eq.s32.totalorder %s20, 1
      %p85 = por %p83, %p84
      %p87 = scmp.ne.s32.totalorder %s70, %s86
      %p88 = scmp.eq.s32.totalorder %s20, 0
      %p89 = por %p87, %p88
      %s90 = ssub.s32 %s21, %s33
      %p91 = scmp.eq.s32.totalorder %s90, 0
      %s93 = sadd.s32 %s92, 1
      %s94 = scalar_select %p91, %s92, %s93
      %p97 = pneg %p91
      %p98 = scmp.eq.s32.totalorder %s14, 1
      %p99 = por %p97, %p98
      %p100 = scmp.ne.s32.totalorder %s92, %s95
      %p101 = scmp.eq.s32.totalorder %s14, 0
      %p102 = por %p100, %p101
      %p103 = scmp.ne.s32.totalorder %s92, %s95
      %p104 = scmp.eq.s32.totalorder %s19, 1
      %p105 = por %p103, %p104
      %p106 = scmp.ne.s32.totalorder %s95, %s96
      %p107 = scmp.eq.s32.totalorder %s19, 0
      %p108 = por %p106, %p107
      %p109 = scmp.ne.s32.totalorder %s95, %s96
      %p110 = scmp.eq.s32.totalorder %s20, 1
      %p111 = por %p109, %p110
      %p113 = scmp.ne.s32.totalorder %s96, %s112
      %p114 = scmp.eq.s32.totalorder %s20, 0
      %p115 = por %p113, %p114
      %s116 = ssub.s32 %s21, %s33
      %p117 = scmp.eq.s32.totalorder %s116, 0
      %s119 = sadd.s32 %s118, 1
      %s120 = scalar_select %p117, %s118, %s119
      %p123 = pneg %p117
      %p124 = scmp.eq.s32.totalorder %s14, 1
      %p125 = por %p123, %p124
      %p126 = scmp.ne.s32.totalorder %s118, %s121
      %p127 = scmp.eq.s32.totalorder %s14, 0
      %p128 = por %p126, %p127
      %p129 = scmp.ne.s32.totalorder %s118, %s121
      %p130 = scmp.eq.s32.totalorder %s19, 1
      %p131 = por %p129, %p130
      %p132 = scmp.ne.s32.totalorder %s121, %s122
      %p133 = scmp.eq.s32.totalorder %s19, 0
      %p134 = por %p132, %p133
      %p135 = scmp.ne.s32.totalorder %s121, %s122
      %p136 = scmp.eq.s32.totalorder %s20, 1
      %p137 = por %p135, %p136
      %p139 = scmp.ne.s32.totalorder %s122, %s138
      %p140 = scmp.eq.s32.totalorder %s20, 0
      %p141 = por %p139, %p140
      %s142 = ssub.s32 %s21, %s33
      %p143 = scmp.eq.s32.totalorder %s142, 0
      %s145 = sadd.s32 %s144, 1
      %s146 = scalar_select %p143, %s144, %s145
      %p149 = pneg %p143
      %p150 = scmp.eq.s32.totalorder %s14, 1
      %p151 = por %p149, %p150
      %p152 = scmp.ne.s32.totalorder %s144, %s147
      %p153 = scmp.eq.s32.totalorder %s14, 0
      %p154 = por %p152, %p153
      %p155 = scmp.ne.s32.totalorder %s144, %s147
      %p156 = scmp.eq.s32.totalorder %s19, 1
      %p157 = por %p155, %p156
      %p158 = scmp.ne.s32.totalorder %s147, %s148
      %p159 = scmp.eq.s32.totalorder %s19, 0
      %p160 = por %p158, %p159
      %p161 = scmp.ne.s32.totalorder %s147, %s148
      %p162 = scmp.eq.s32.totalorder %s20, 1
      %p163 = por %p161, %p162
      %p165 = scmp.ne.s32.totalorder %s148, %s164
      %p166 = scmp.eq.s32.totalorder %s20, 0
      %p167 = por %p165, %p166
      %p168 = scmp.le.s32.totalorder 1, %s14
      %p169 = scmp.lt.s32.totalorder %s14, 3
      %p170 = pnand %p168, %p169
      %p171 = pneg %p170
      // Predicated region
      $region9: #{tpu_custom_call.1} parent=5 // pred_check
        _
      $region10: #{tpu_custom_call.1} parent=5 // pred_check_branch
        %173 = sbr.rel (%p170) target = $region12
      $region11: #{tpu_custom_call.1} parent=5 // pred_region
        %s174 = ssub.s32 %s14, 1
      $region12: #{tpu_custom_call.1} parent=5 // pred_fallthru
        _
      %p175 = scmp.lt.s32.totalorder %s14, 2
      // Predicated region
      $region13: #{tpu_custom_call.1} parent=5 // pred_check
        %p176 = pneg %p175
      $region14: #{tpu_custom_call.1} parent=5 // pred_check_branch
        %178 = sbr.rel (%p176) target = $region16
      $region15: #{tpu_custom_call.1} parent=5 // pred_region
        // Predicated region
        $region17: #{tpu_custom_call.1} parent=15 // pred_check
          %p179 = pneg %p48
        $region18: #{tpu_custom_call.1} parent=15 // pred_check_branch
          %181 = sbr.rel (%p179) target = $region20
        $region19: #{tpu_custom_call.1} parent=15 // pred_region
          %s182 = sand.u32 %s38, 1
          %s183 = scalar_lea.sflag [#allocation3], %s182
          %s184 = sand.u32 %s38, 1
          %s185 = smul.addr %s184, 8
          %s186 = scalar_lea.vmem [#allocation2], %s185
          %s187 = smul.u32 2, %s22
          %189 = vsyncadd %s183, 0
          %s190 = smul.addr %s21, 2
          %s191 = sadd.s32 %s187, %s190
          %s192 = smul.addr %s191, 4
          %s193 = scalar_lea.hbm %s0, %s192
          %s195 = sshll.u32 %s193, 4
          %s196 = int_to_ptr.hbm [resolvable:$true] %s195
          %s197 = sshll.u32 %s186, 4
          %s198 = int_to_ptr.vmem [resolvable:$true] %s197
          %200 = dma.hbm_to_vmem [thread:$0]  %s196, 128, %s198, %s183
        $region20: #{tpu_custom_call.1} parent=15 // pred_fallthru
          _
        // Predicated region
        $region21: #{tpu_custom_call.1} parent=15 // pred_check
          %p201 = pneg %p76
        $region22: #{tpu_custom_call.1} parent=15 // pred_check_branch
          %203 = sbr.rel (%p201) target = $region24
        $region23: #{tpu_custom_call.1} parent=15 // pred_region
          %s204 = smul.u32 2, %s22
          %p205 = scmp.lt.s32.totalorder %s21, 1
          %s206 = scalar_select %p205, %s21, 1
          %p207 = scmp.lt.s32.totalorder %s204, 1
          %s208 = scalar_select %p207, %s204, 1
          %s209 = smul.addr %s206, 2
          %s210 = sadd.s32 %s208, %s209
          %s211 = scalar_lea.vmem %s1, %s210
          %s212 = smul.u32 2, %s22
        $region24: #{tpu_custom_call.1} parent=15 // pred_fallthru
          _
      $region16: #{tpu_custom_call.1} parent=5 // pred_fallthru
        _
      %p213 = scmp.le.s32.totalorder 1, %s14
      %p214 = scmp.lt.s32.totalorder %s14, 3
      %p215 = pnand %p213, %p214
      %p216 = pneg %p215
      // Predicated region
      $region25: #{tpu_custom_call.1} parent=5 // pred_check
        _
      $region26: #{tpu_custom_call.1} parent=5 // pred_check_branch
        %218 = sbr.rel (%p215) target = $region28
      $region27: #{tpu_custom_call.1} parent=5 // pred_region
        %s219 = ssub.s32 %s14, 1
        %s220 = sand.u32 %s41, 1
        %s221 = scalar_lea.sflag [#allocation3], %s220
        %s222 = sand.u32 %s41, 1
        %s223 = smul.addr %s222, 8
        %s224 = scalar_lea.vmem [#allocation2], %s223
        // Predicated region
        $region29: #{tpu_custom_call.1} parent=27 // pred_check
          %p225 = pneg %p54
        $region30: #{tpu_custom_call.1} parent=27 // pred_check_branch
          %227 = sbr.rel (%p225) target = $region32
        $region31: #{tpu_custom_call.1} parent=27 // pred_region
          %229 = dma.done %s221, 128
        $region32: #{tpu_custom_call.1} parent=27 // pred_fallthru
          _
        %s230 = sand.u32 %s41, 1
        %s231 = scalar_lea.sflag [#allocation3], %s230
        %s232 = sand.u32 %s41, 1
        %s233 = smul.addr %s232, 8
        %s234 = scalar_lea.vmem [#allocation2], %s233
        %p235 = pneg %p54
        %p236 = pneg %p51
        %s237 = smul.u32 2, %s24
        %p238 = scmp.lt.s32.totalorder %s23, 1
        %s239 = scalar_select %p238, %s23, 1
        %p240 = scmp.lt.s32.totalorder %s237, 1
        %s241 = scalar_select %p240, %s237, 1
        %s242 = smul.addr %s239, 2
        %s243 = sadd.s32 %s241, %s242
        %s244 = scalar_lea.vmem %s1, %s243
        %p245 = pneg %p82
        %p246 = pneg %p79
        %p247 = pneg %p108
        %p248 = pneg %p105
        %p249 = scmp.lt.s32.totalorder %s23, 1
        %s250 = scalar_select %p249, %s23, 1
        %s251 = scalar_lea.vmem %s2, %s250
        %p252 = pneg %p134
        %p253 = pneg %p131
        %p254 = scmp.lt.s32.totalorder %s23, 1
        %s255 = scalar_select %p254, %s23, 1
        %s256 = smul.addr %s255, 4
        %s257 = scalar_lea.vmem %s3, %s256
        %p258 = pneg %p160
        %p259 = pneg %p157
        %p260 = scmp.lt.s32.totalorder %s23, 1
        %s261 = scalar_select %p260, %s23, 1
        %s262 = smul.addr %s261, 4
        %s263 = scalar_lea.vmem %s4, %s262
        %s264 = smul.u32 2, %s24
        %s265 = smul.u32 2, %s24
        %p266 = scmp.lt.s32.totalorder %s23, 1
        %s267 = scalar_select %p266, %s23, 1
        %p268 = scmp.lt.s32.totalorder %s265, 1
        %s269 = scalar_select %p268, %s265, 1
        %s270 = smul.addr %s267, 2
        %s271 = sadd.s32 %s269, %s270
        %s272 = scalar_lea.vmem %s1, %s271
        %s273 = smul.u32 2, %s24
        %p274 = scmp.lt.s32.totalorder %s23, 1
        %s275 = scalar_select %p274, %s23, 1
        %s276 = scalar_lea.vmem %s2, %s275
        %p277 = scmp.lt.s32.totalorder %s23, 1
        %s278 = scalar_select %p277, %s23, 1
        %s279 = smul.addr %s278, 4
        %s280 = scalar_lea.vmem %s3, %s279
        %p281 = scmp.lt.s32.totalorder %s23, 1
        %s282 = scalar_select %p281, %s23, 1
        %s283 = smul.addr %s282, 4
        %s284 = scalar_lea.vmem %s4, %s283
        %p285 = scmp.eq.s32.totalorder %s24, 0
        // Predicated region
        $region33: #{tpu_custom_call.1} parent=27 // pred_check
          %p286 = pneg %p285
        $region34: #{tpu_custom_call.1} parent=27 // pred_check_branch
          %288 = sbr.rel (%p286) target = $region36
        $region35: #{tpu_custom_call.1} parent=27 // pred_region
          %vm289 = vcmask 0
          %290 = vst.msk [vmem:[%s276] sm:$0x1] %vm289, 0.0
          %vm291 = vcmask 3072
          %292 = vst.msk [vmem:[%s280] sm:$0xf] %vm291, 0.0
          %293 = vst.msk [vmem:[%s284] sm:$0xf] %vm291, 0.0
        $region36: #{tpu_custom_call.1} parent=27 // pred_fallthru
          _
        %v294 = vld [vmem:[%s224] sm:$0xff]
        %v295 = vld [vmem:[%s272] sm:$0x3]
        %v296 = vunpack.c.0.s8 %v295
        %298 = vst [vmem:[#allocation1] ss:$2 sm:$0xff] %v294
        %v299 = vld.sshfl [vmem:[#allocation1] sm:$0xff pattern:$0x75316420]
        %v300 = vld.sshfl [vmem:[#allocation1 + $0x8] sm:$0xff pattern:$0x75316420]
        %vm303 = vcmask 1043456
        %v304 = vsel %vm303, %v299, -inf
        %v305 = vrot.slane %v304, 4
        %v306 = vmax.f32 %v304, %v305
        %v307 = vrot.slane %v306, 2
        %v308 = vmax.f32 %v306, %v307
        %v309 = vrot.slane %v308, 1
        %v310 = vmax.f32 %v308, %v309
        %v311 = vsel %vm303, %v300, -inf
        %v312 = vrot.slane %v311, 4
        %v313 = vmax.f32 %v311, %v312
        %v314 = vrot.slane %v313, 2
        %v315 = vmax.f32 %v313, %v314
        %v316 = vrot.slane %v315, 1
        %v317 = vmax.f32 %v315, %v316
        %v320 = vrot.slane %v317, 4
        %v321 = vsel %vm303, %v310, %v320
        %v323 = vsub.f32 %v294, %v321
        %v324 = vmul.f32 %v323, 1.442695
        %v325 = vpow.pop %v324
        %327 = vst [vmem:[#allocation1] ss:$2 sm:$0xff] %v325
        %v328 = vld.sshfl [vmem:[#allocation1] sm:$0xff pattern:$0x75316420]
        %v329 = vld.sshfl [vmem:[#allocation1 + $0x8] sm:$0xff pattern:$0x75316420]
        %v332 = vsel %vm303, %v328, 0.0
        %v333 = vrot.slane %v332, 4
        %v334 = vadd.f32 %v332, %v333
        %v335 = vrot.slane %v334, 2
        %v336 = vadd.f32 %v334, %v335
        %v337 = vrot.slane %v336, 1
        %v338 = vadd.f32 %v336, %v337
        %v339 = vsel %vm303, %v329, 0.0
        %v340 = vrot.slane %v339, 4
        %v341 = vadd.f32 %v339, %v340
        %v342 = vrot.slane %v341, 2
        %v343 = vadd.f32 %v341, %v342
        %v344 = vrot.slane %v343, 1
        %v345 = vadd.f32 %v343, %v344
        %v346 = vlaneseq
        %v347 = vshrl.u32 %v346, 7
        %v348 = vperm.slane %v296, 0
        %v349 = vperm.slane %v296, 4
        %v350 = vperm.slane %v348, 0
        %v351 = vperm.slane %v349, 0
        %vm352 = vcmp.eq.s32.totalorder %v347, %v350
        %vm353 = vcmp.eq.s32.totalorder %v347, %v351
        %354 = vst [vmem:[#allocation1] ss:$2 sm:$0xff] %v294
        %v355 = vld.sshfl [vmem:[#allocation1] sm:$0xff pattern:$0x75316420]
        %v356 = vld.sshfl [vmem:[#allocation1 + $0x8] sm:$0xff pattern:$0x75316420]
        %v359 = vsel %vm352, %v355, 0.0
        %v360 = vsel %vm353, %v356, 0.0
        %v361 = vsel %vm303, %v359, 0.0
        %v362 = vrot.slane %v361, 4
        %v363 = vadd.f32 %v361, %v362
        %v364 = vrot.slane %v363, 2
        %v365 = vadd.f32 %v363, %v364
        %v366 = vrot.slane %v365, 1
        %v367 = vadd.f32 %v365, %v366
        %v368 = vsel %vm303, %v360, 0.0
        %v369 = vrot.slane %v368, 4
        %v370 = vadd.f32 %v368, %v369
        %v371 = vrot.slane %v370, 2
        %v372 = vadd.f32 %v370, %v371
        %v373 = vrot.slane %v372, 1
        %v374 = vadd.f32 %v372, %v373
        %v375 = vlog2.pop %v338
        %v376 = vmul.f32 %v375, 0.6931472
        %v377 = vlog2.pop %v345
        %v378 = vmul.f32 %v377, 0.6931472
        %v379 = vadd.f32 %v376, %v310
        %v380 = vadd.f32 %v378, %v317
        %v381 = vsub.f32 %v379, %v367
        %v382 = vsub.f32 %v380, %v374
        %v383 = vld [vmem:[%s276] sm:$0x1]
        %vm384 = vcmask 1040384
        %v385 = vsel %vm384, %v381, 0.0
        %v386 = vsel %vm384, %v382, 0.0
        %v387 = vadd.f32 %v385, %v386
        %388 = vadd.xlane.f32.xlu0 %v387
        %v389 = vpop.xlane.xlu0 %388
        %v390 = vrot.slane %v389, 4
        %v391 = vadd.f32 %v389, %v390
        %v392 = vrot.slane %v391, 2
        %v393 = vadd.f32 %v391, %v392
        %v394 = vrot.slane %v393, 1
        %v395 = vadd.f32 %v393, %v394
        %s396 = vtos %v395
        %v397 = vstv %s396
        %v398 = vadd.f32 %v383, %v397
        %vm399 = vcmask 0
        %400 = vst.msk [vmem:[%s276] sm:$0x1] %vm399, %v398
        %v401 = vrcp.pop %v338
        %v402 = vrcp.pop %v345
        %v403 = vsel %vm352, 1, 0
        %v404 = vsel %vm353, 1, 0
        %v405 = vcvt.s32.f32 %v403
        %v406 = vcvt.s32.f32 %v404
        %v407 = vld [vmem:[%s280] sm:$0xf]
        %v410 = vrot.slane %v402, 4
        %v411 = vsel %vm303, %v401, %v410
        %v413 = vmul.f32 %v325, %v411
        %415 = vst [vmem:[#allocation1] ss:$2 sm:$0xff] %v413
        %v416 = vld.sshfl [vmem:[#allocation1] sm:$0xff pattern:$0x75316420]
        %v417 = vld.sshfl [vmem:[#allocation1 + $0x8] sm:$0xff pattern:$0x75316420]
        %v420 = vsel %vm303, %v416, 0.0
        %v421 = vsel %vm303, %v417, 0.0
        %v422 = vadd.f32 %v420, %v421
        %423 = vadd.xlane.f32.xlu0 %v422
        %v424 = vpop.xlane.xlu0 %423
        %v425 = vadd.f32 %v407, %v424
        %vm426 = vcmask 3072
        %427 = vst.msk [vmem:[%s280] sm:$0xf] %vm426, %v425
        %v428 = vld [vmem:[%s284] sm:$0xf]
        %v429 = vsel %vm303, %v405, 0.0
        %v430 = vsel %vm303, %v406, 0.0
        %v431 = vadd.f32 %v429, %v430
        %432 = vadd.xlane.f32.xlu0 %v431
        %v433 = vpop.xlane.xlu0 %432
        %v434 = vadd.f32 %v428, %v433
        %435 = vst.msk [vmem:[%s284] sm:$0xf] %vm426, %v434
        %p436 = scmp.lt.s32.totalorder %s23, 1
        %s437 = scalar_select %p436, %s23, 1
        %s438 = scalar_lea.vmem %s2, %s437
        %p439 = scmp.lt.s32.totalorder %s23, 1
        %s440 = scalar_select %p439, %s23, 1
        %s441 = smul.addr %s440, 4
        %s442 = scalar_lea.vmem %s3, %s441
        %p443 = scmp.lt.s32.totalorder %s23, 1
        %s444 = scalar_select %p443, %s23, 1
        %s445 = smul.addr %s444, 4
        %s446 = scalar_lea.vmem %s4, %s445
        // Predicated region
        $region37: #{tpu_custom_call.1} parent=27 // pred_check
          %p447 = pneg %p105
        $region38: #{tpu_custom_call.1} parent=27 // pred_check_branch
          %449 = sbr.rel (%p447) target = $region40
        $region39: #{tpu_custom_call.1} parent=27 // pred_region
          _
        $region40: #{tpu_custom_call.1} parent=27 // pred_fallthru
          _
        // Predicated region
        $region41: #{tpu_custom_call.1} parent=27 // pred_check
          %p450 = pneg %p131
        $region42: #{tpu_custom_call.1} parent=27 // pred_check_branch
          %452 = sbr.rel (%p450) target = $region44
        $region43: #{tpu_custom_call.1} parent=27 // pred_region
          _
        $region44: #{tpu_custom_call.1} parent=27 // pred_fallthru
          _
        // Predicated region
        $region45: #{tpu_custom_call.1} parent=27 // pred_check
          %p453 = pneg %p157
        $region46: #{tpu_custom_call.1} parent=27 // pred_check_branch
          %455 = sbr.rel (%p453) target = $region48
        $region47: #{tpu_custom_call.1} parent=27 // pred_region
          _
        $region48: #{tpu_custom_call.1} parent=27 // pred_fallthru
          _
      $region28: #{tpu_custom_call.1} parent=5 // pred_fallthru
        _
      %p456 = scmp.le.s32.totalorder 2, %s14
      // Predicated region
      $region49: #{tpu_custom_call.1} parent=5 // pred_check
        %p457 = pneg %p456
      $region50: #{tpu_custom_call.1} parent=5 // pred_check_branch
        %459 = sbr.rel (%p457) target = $region52
      $region51: #{tpu_custom_call.1} parent=5 // pred_region
        %s460 = ssub.s32 %s14, 2
        // Predicated region
        $region53: #{tpu_custom_call.1} parent=51 // pred_check
          %p461 = pneg %p111
        $region54: #{tpu_custom_call.1} parent=51 // pred_check_branch
          %463 = sbr.rel (%p461) target = $region56
        $region55: #{tpu_custom_call.1} parent=51 // pred_region
          %p464 = scmp.lt.s32.totalorder %s25, 1
          %s465 = scalar_select %p464, %s25, 1
          %s466 = scalar_lea.vmem %s2, %s465
        $region56: #{tpu_custom_call.1} parent=51 // pred_fallthru
          _
        // Predicated region
        $region57: #{tpu_custom_call.1} parent=51 // pred_check
          %p467 = pneg %p137
        $region58: #{tpu_custom_call.1} parent=51 // pred_check_branch
          %469 = sbr.rel (%p467) target = $region60
        $region59: #{tpu_custom_call.1} parent=51 // pred_region
          %p470 = scmp.lt.s32.totalorder %s25, 1
          %s471 = scalar_select %p470, %s25, 1
          %s472 = smul.addr %s471, 4
          %s473 = scalar_lea.vmem %s3, %s472
        $region60: #{tpu_custom_call.1} parent=51 // pred_fallthru
          _
        // Predicated region
        $region61: #{tpu_custom_call.1} parent=51 // pred_check
          %p474 = pneg %p163
        $region62: #{tpu_custom_call.1} parent=51 // pred_check_branch
          %476 = sbr.rel (%p474) target = $region64
        $region63: #{tpu_custom_call.1} parent=51 // pred_region
          %p477 = scmp.lt.s32.totalorder %s25, 1
          %s478 = scalar_select %p477, %s25, 1
          %s479 = smul.addr %s478, 4
          %s480 = scalar_lea.vmem %s4, %s479
        $region64: #{tpu_custom_call.1} parent=51 // pred_fallthru
          _
      $region52: #{tpu_custom_call.1} parent=5 // pred_fallthru
        _
    $region6: #{tpu_custom_call.1} parent=1 // loop_footer
      %s18 = sadd.s32 1, %s14
    $region7: #{tpu_custom_call.1} parent=1 // loop_footer_branch
      %13 = sbr.rel target = $region3
    $region8: #{tpu_custom_call.1} parent=1 // loop_exit
      _
    %481 = vsyncpa [#allocation3], 1
    %s482 = scalar_lea.sflag [#allocation3], 1
    %483 = vsyncpa %s482, 1

</llo_original>
